<compile_context>
chip_gen: v5e
topology: v5e:2x2
jax: 0.10.0
libtpu: 0.0.40
codegen_flags: <defaults>
</compile_context>

<pallas_src>
import jax
import jax.numpy as jnp
from jax.experimental import pallas as pl
from jax.experimental.pallas import tpu as pltpu

# ----- Hyperparameters (faithful to the PyTorch script) -----
m = 2          # embedding dimension
n_step = 2     # context window length
n_hidden = 2   # hidden layer size

sentences = ["i like dog", "i love coffee", "i hate milk"]
word_list = sorted(set(" ".join(sentences).split()))   # deterministic ordering
word_dict = {w: i for i, w in enumerate(word_list)}
n_class = len(word_dict)                                # vocabulary size (7)

K = n_step * m          # flattened context width (4)
KA = K + 1              # + ones column for bias folding (5)
HID_OFF = KA            # hidden activations live in lane cols [KA, KA+n_hidden)
LANES = 128             # native lane width (f32 vreg is 8 x 128)
SUBLANES = 8


def nnlm_kernel(xa_ref, w_ref, out_ref):
    """Fused NNLM forward on padded, tile-aligned slabs.

    xa_ref : (BP, 128)     per row: [x_emb (K) | 1 | zeros]; rows >= B are zero.
    w_ref  : (2, 128, 128) packed weights:
               [0] rows 0:K, cols HID_OFF:HID_OFF+n_hidden = H
                   row  K,   cols HID_OFF:HID_OFF+n_hidden = d
               [1] rows 0:K = W, row K = b, rows HID_OFF:HID_OFF+n_hidden = U
    out_ref: (BP, 128)     b + X@W + tanh(d + X@H) @ U in cols 0:n_class.
    """
    xa = xa_ref[...]                                                     # (BP, 128)
    # Stage 1: tanh(d + X @ H).  w_ref[0] is zero outside the hidden columns,
    # so hid is tanh(0) = 0 everywhere except cols [HID_OFF, HID_OFF+n_hidden).
    hid = jnp.tanh(jnp.dot(xa, w_ref[0], preferred_element_type=jnp.float32))
    # xa's live columns (< KA) and hid's live columns (>= KA) are disjoint, so a
    # plain add builds the combined activation slab [x_emb | 1 | tanh | zeros].
    combined = xa + hid
    # Stage 2: one matmul against [W; b; U] gives b + X@W + tanh@U.
    out = jnp.dot(combined, w_ref[1], preferred_element_type=jnp.float32)
    out_ref[...] = out.astype(out_ref.dtype)


def _pack_weights(H, W, d, U, b):
    """Pack (H;d) and (W;b;U) into one (2, 128, 128) lane-dense f32 buffer."""
    w1 = (jnp.zeros((LANES, LANES), jnp.float32)
          .at[:K, HID_OFF:HID_OFF + n_hidden].set(H)
          .at[K, HID_OFF:HID_OFF + n_hidden].set(d))
    w2 = (jnp.zeros((LANES, LANES), jnp.float32)
          .at[:K, :n_class].set(W)
          .at[K, :n_class].set(b)
          .at[HID_OFF:HID_OFF + n_hidden, :n_class].set(U))
    return jnp.stack([w1, w2], axis=0)


@jax.jit
def nnlm_forward(X_idx, C, H, W, d, U, b):
    """Full NNLM forward.  Gather/pad/pack is JAX glue; fused math is Pallas."""
    B = X_idx.shape[0]
    BP = max(SUBLANES, ((B + SUBLANES - 1) // SUBLANES) * SUBLANES)

    # Embedding + flatten (equivalent to self.C(X).view(-1, n_step*m)), then
    # append a ones column (bias folding) and pad to an (8,128)-aligned slab.
    x_emb = jnp.take(C, X_idx, axis=0).reshape(B, K).astype(jnp.float32)
    xa = jnp.concatenate([x_emb, jnp.ones((B, 1), jnp.float32)], axis=1)  # (B, KA)
    xa_pad = jnp.zeros((BP, LANES), jnp.float32).at[:B, :KA].set(xa)

    wpack = _pack_weights(H, W, d, U, b)                                  # (2,128,128)

    out_pad = pl.pallas_call(
        nnlm_kernel,
        out_shape=jax.ShapeDtypeStruct((BP, LANES), jnp.float32),
        in_specs=[
            pl.BlockSpec(memory_space=pltpu.MemorySpace.VMEM),
            pl.BlockSpec(memory_space=pltpu.MemorySpace.VMEM),
        ],
        out_specs=pl.BlockSpec(memory_space=pltpu.MemorySpace.VMEM),
    )(xa_pad, wpack)
    # TODO(synk): at realistic batch/vocab sizes, tile the batch axis with a
    # "parallel" grid dimension (megacore / 2-TC sharding) and keep wpack
    # resident via a constant index_map; not needed at B=3, n_class=7.
    return out_pad[:B, :n_class]


def nnlm_reference(X_idx, C, H, W, d, U, b):
    x = jnp.take(C, X_idx, axis=0).reshape(X_idx.shape[0], K)
    tanh = jnp.tanh(d + x @ H)
    return b + x @ W + tanh @ U


if __name__ == "__main__":
    key = jax.random.PRNGKey(0)
    k_c, k_h, k_w, k_d, k_u, k_b = jax.random.split(key, 6)

    # Deterministic parameter init (shapes match nn.Embedding / nn.Parameter defs)
    C = jax.random.normal(k_c, (n_class, m), dtype=jnp.float32)           # embedding
    H = jax.random.normal(k_h, (K, n_hidden), dtype=jnp.float32)
    W = jax.random.normal(k_w, (K, n_class), dtype=jnp.float32)
    d = jax.random.normal(k_d, (n_hidden,), dtype=jnp.float32)
    U = jax.random.normal(k_u, (n_hidden, n_class), dtype=jnp.float32)
    b = jax.random.normal(k_b, (n_class,), dtype=jnp.float32)

    # Inputs: first n_step words of each sentence (like the original make_batch)
    X_idx = jnp.array(
        [[word_dict[w] for w in s.split()[:n_step]] for s in sentences],
        dtype=jnp.int32,
    )  # shape (3, 2)

    out = nnlm_forward(X_idx, C, H, W, d, U, b)
    out = jax.block_until_ready(out)

    ref = nnlm_reference(X_idx, C, H, W, d, U, b)
    assert out.shape == (len(sentences), n_class)
    assert jnp.allclose(out, ref, atol=1e-5, rtol=1e-5), "mismatch vs JAX reference"

    print("KERNEL_OK")
</pallas_src>

<mosaic_0001>
module attributes {stable_mosaic.version = 11 : i64} {
  func.func @nnlm_kernel(%arg0: memref<8x128xf32, #tpu.memory_space<vmem>>, %arg1: memref<2x128x128xf32, #tpu.memory_space<vmem>>, %arg2: memref<8x128xf32, #tpu.memory_space<vmem>>) attributes {dimension_semantics = [], scalar_prefetch = 0 : i64, scratch_operands = 0 : i64, tpu.core_type = #tpu.core_type<tc>} {
    %c0 = arith.constant 0 : index
    %c0_0 = arith.constant 0 : index
    %0 = vector.load %arg0[%c0, %c0_0] : memref<8x128xf32, #tpu.memory_space<vmem>>, vector<8x128xf32>
    %c0_1 = arith.constant 0 : index
    %c0_2 = arith.constant 0 : index
    %c0_3 = arith.constant 0 : index
    %1 = vector.load %arg1[%c0_1, %c0_2, %c0_3] : memref<2x128x128xf32, #tpu.memory_space<vmem>>, vector<1x128x128xf32>
    %2 = vector.shape_cast %1 : vector<1x128x128xf32> to vector<128x128xf32>
    %cst = arith.constant dense<0.000000e+00> : vector<8x128xf32>
    %3 = tpu.matmul %0, %2, %cst {dimension_numbers = #tpu.dot_dimension_numbers<[1], [0], [0], [1], [0, 0, 1, 1], [], []>} : vector<8x128xf32>, vector<128x128xf32>, vector<8x128xf32> -> vector<8x128xf32>
    %4 = math.tanh %3 : vector<8x128xf32>
    %5 = arith.addf %0, %4 : vector<8x128xf32>
    %c1 = arith.constant 1 : index
    %c0_4 = arith.constant 0 : index
    %c0_5 = arith.constant 0 : index
    %6 = vector.load %arg1[%c1, %c0_4, %c0_5] : memref<2x128x128xf32, #tpu.memory_space<vmem>>, vector<1x128x128xf32>
    %7 = vector.shape_cast %6 : vector<1x128x128xf32> to vector<128x128xf32>
    %cst_6 = arith.constant dense<0.000000e+00> : vector<8x128xf32>
    %8 = tpu.matmul %5, %7, %cst_6 {dimension_numbers = #tpu.dot_dimension_numbers<[1], [0], [0], [1], [0, 0, 1, 1], [], []>} : vector<8x128xf32>, vector<128x128xf32>, vector<8x128xf32> -> vector<8x128xf32>
    %c0_7 = arith.constant 0 : index
    %c0_8 = arith.constant 0 : index
    %9 = vector.load %arg2[%c0_7, %c0_8] : memref<8x128xf32, #tpu.memory_space<vmem>>, vector<8x128xf32>
    tpu.vector_store %arg2[%c0_7, %c0_8], %8 {strides = array<i32>} : memref<8x128xf32, #tpu.memory_space<vmem>>, vector<8x128xf32>,
    return
  }
}

</mosaic_0001>

<llo_original>
// kernel: nnlm_forward.1
$region0: #{nnlm_forward.1}
  #allocation0 [shape = 'u32[]', space=smem, size = 0x4, offset = 0x4, fixed_abs, tag = 'smem constant byte address 0x4 - core index']
  #allocation1 [shape = 'u32[72,128]{1,0:T(1,128)}', space=vmem, size = 0x9000, scoped, tag = 'internal scratch']
  %s0 = inlined_call_operand.vmem [shape: f32[8,128], index: 0, kind: input, shape index: {}]
  %s1 = inlined_call_operand.vmem [shape: f32[2,128,128], index: 1, kind: input, shape index: {}]
  %s2 = inlined_call_operand.vmem [shape: f32[8,128], index: 2, kind: output, shape index: {}]
  %s3 = sld [smem:[#allocation0]]
  $region18: #{nnlm_forward.1} parent=0
    _
  %s5 = ssub.s32 1, %s3
  %s6 = scalar_select 0, %s5, %s3
  // Predicated region
  $region2: #{nnlm_forward.1} parent=0 // pred_check
    _
  $region3: #{nnlm_forward.1} parent=0 // pred_check_branch
    %8 = sbr.rel (0) target = $region5
  $region4: #{nnlm_forward.1} parent=0 // pred_region
    _
  $region5: #{nnlm_forward.1} parent=0 // pred_fallthru
    _
  // Predicated region
  $region6: #{nnlm_forward.1} parent=0 // pred_check
    _
  $region7: #{nnlm_forward.1} parent=0 // pred_check_branch
    %10 = sbr.rel (0) target = $region9
  $region8: #{nnlm_forward.1} parent=0 // pred_region
    _
  $region9: #{nnlm_forward.1} parent=0 // pred_fallthru
    _
  %v11 = vld [vmem:[%s0] sm:$0xff]
  %v12 = vld [vmem:[%s1] sm:$0xff]
  %v13 = vld [vmem:[%s1 + $0x8] sm:$0xff]
  %v14 = vld [vmem:[%s1 + $0x10] sm:$0xff]
  %v15 = vld [vmem:[%s1 + $0x18] sm:$0xff]
  %v16 = vld [vmem:[%s1 + $0x20] sm:$0xff]
  %v17 = vld [vmem:[%s1 + $0x28] sm:$0xff]
  %v18 = vld [vmem:[%s1 + $0x30] sm:$0xff]
  %v19 = vld [vmem:[%s1 + $0x38] sm:$0xff]
  %v20 = vld [vmem:[%s1 + $0x40] sm:$0xff]
  %v21 = vld [vmem:[%s1 + $0x48] sm:$0xff]
  %v22 = vld [vmem:[%s1 + $0x50] sm:$0xff]
  %v23 = vld [vmem:[%s1 + $0x58] sm:$0xff]
  %v24 = vld [vmem:[%s1 + $0x60] sm:$0xff]
  %v25 = vld [vmem:[%s1 + $0x68] sm:$0xff]
  %v26 = vld [vmem:[%s1 + $0x70] sm:$0xff]
  %v27 = vld [vmem:[%s1 + $0x78] sm:$0xff]
  %28 = vmatpush.msra.mxu0 %v27
  %29 = vmatpush.msra.mxu0 %v26
  %30 = vmatpush.msra.mxu0 %v25
  %31 = vmatpush.msra.mxu0 %v24
  %32 = vmatpush.msra.mxu0 %v23
  %33 = vmatpush.msra.mxu0 %v22
  %34 = vmatpush.msra.mxu0 %v21
  %35 = vmatpush.msra.mxu0 %v20
  %36 = vmatpush.msra.mxu0 %v19
  %37 = vmatpush.msra.mxu0 %v18
  %38 = vmatpush.msra.mxu0 %v17
  %39 = vmatpush.msra.mxu0 %v16
  %40 = vmatpush.msra.mxu0 %v15
  %41 = vmatpush.msra.mxu0 %v14
  %42 = vmatpush.msra.mxu0 %v13
  %43 = vmatpush.msra.mxu0 %v12
  %44 = vmatmul.f32.gmra.mxu0 %v11
  %v45 = vpop.f32.mrf.mxu0
  %v46 = vadd.f32 0.0, %v45
  %47 = vdwg.mxu0
  %v48 = vtanh.pop %v46
  %v49 = vadd.f32 %v11, %v48
  %s50 = scalar_lea.vmem %s1, 128
  %v51 = vld [vmem:[%s50] sm:$0xff]
  %v52 = vld [vmem:[%s50 + $0x8] sm:$0xff]
  %v53 = vld [vmem:[%s50 + $0x10] sm:$0xff]
  %v54 = vld [vmem:[%s50 + $0x18] sm:$0xff]
  %v55 = vld [vmem:[%s50 + $0x20] sm:$0xff]
  %v56 = vld [vmem:[%s50 + $0x28] sm:$0xff]
  %v57 = vld [vmem:[%s50 + $0x30] sm:$0xff]
  %v58 = vld [vmem:[%s50 + $0x38] sm:$0xff]
  %v59 = vld [vmem:[%s50 + $0x40] sm:$0xff]
  %v60 = vld [vmem:[%s50 + $0x48] sm:$0xff]
  %v61 = vld [vmem:[%s50 + $0x50] sm:$0xff]
  %v62 = vld [vmem:[%s50 + $0x58] sm:$0xff]
  %v63 = vld [vmem:[%s50 + $0x60] sm:$0xff]
  %v64 = vld [vmem:[%s50 + $0x68] sm:$0xff]
  %v65 = vld [vmem:[%s50 + $0x70] sm:$0xff]
  %v66 = vld [vmem:[%s50 + $0x78] sm:$0xff]
  %67 = vmatpush.msra.mxu0 %v66
  %68 = vmatpush.msra.mxu0 %v65
  %69 = vmatpush.msra.mxu0 %v64
  %70 = vmatpush.msra.mxu0 %v63
  %71 = vmatpush.msra.mxu0 %v62
  %72 = vmatpush.msra.mxu0 %v61
  %73 = vmatpush.msra.mxu0 %v60
  %74 = vmatpush.msra.mxu0 %v59
  %75 = vmatpush.msra.mxu0 %v58
  %76 = vmatpush.msra.mxu0 %v57
  %77 = vmatpush.msra.mxu0 %v56
  %78 = vmatpush.msra.mxu0 %v55
  %79 = vmatpush.msra.mxu0 %v54
  %80 = vmatpush.msra.mxu0 %v53
  %81 = vmatpush.msra.mxu0 %v52
  %82 = vmatpush.msra.mxu0 %v51
  %83 = vmatmul.f32.gmra.mxu0 %v49
  %v84 = vpop.f32.mrf.mxu0
  %v85 = vadd.f32 0.0, %v84
  %86 = vdwg.mxu0
  %87 = vst [vmem:[%s2] sm:$0xff] %v85
  // Predicated region
  $region10: #{nnlm_forward.1} parent=0 // pred_check
    _
  $region11: #{nnlm_forward.1} parent=0 // pred_check_branch
    %89 = sbr.rel (0) target = $region13
  $region12: #{nnlm_forward.1} parent=0 // pred_region
    _
  $region13: #{nnlm_forward.1} parent=0 // pred_fallthru
    _
  // Predicated region
  $region14: #{nnlm_forward.1} parent=0 // pred_check
    _
  $region15: #{nnlm_forward.1} parent=0 // pred_check_branch
    %91 = sbr.rel (0) target = $region17
  $region16: #{nnlm_forward.1} parent=0 // pred_region
    _
  $region17: #{nnlm_forward.1} parent=0 // pred_fallthru
    _

</llo_original>
